<compile_context>
chip_gen: v7x
topology: tpu7x:2x2x1
jax: 0.10.0
libtpu: 0.0.40
codegen_flags: <defaults>
</compile_context>

<pallas_src>
import functools
import math

import jax
import jax.numpy as jnp
from jax.experimental import pallas as pl
from jax.experimental.pallas import tpu as pltpu


def _round_up(x, m):
    return (x + m - 1) // m * m


def _value_encoder_kernel(t_ref, wexp_ref, b_ref, o_ref):
    # t_ref:    (TM, P)      packed input values (P original rows per packed row)
    # wexp_ref: (P, P*E)     block-diagonal expand matrix kron(I_P, w)
    # b_ref:    (1, P*E)     bias tiled P times
    # o_ref:    (TM, P*E)    lane-dense output slab (P*E is a multiple of 128)
    z = jnp.dot(
        t_ref[...],
        wexp_ref[...],
        preferred_element_type=jnp.float32,
        precision=jax.lax.Precision.HIGHEST,
    )
    z = z + b_ref[...]
    o_ref[...] = jnp.maximum(z, 0.0).astype(o_ref.dtype)


def _choose_row_tile(n_packed, tm_cap, sub):
    """Pick the packed-row tile.

    Big blocks amortize the ~0.35 us per-step overhead; on large problems keep
    an even number of steps >= 4 so v7x's two TensorCores stay balanced under
    dimension_semantics=("parallel",).
    """
    small = n_packed < 4 * 512
    if small and n_packed <= tm_cap:
        # Single full-extent block: no row-divisibility constraint applies.
        return n_packed
    steps = pl.cdiv(n_packed, tm_cap)
    if not small:
        steps = max(steps, 4)
        if steps % 2:
            steps += 1
    tm = _round_up(pl.cdiv(n_packed, steps), sub)
    return max(sub, min(tm_cap, tm))


@functools.partial(
    jax.jit,
    static_argnames=("output_dim", "row_tile", "min_pallas_rows", "out_dtype"),
)
def value_encoder_forward(x, params, *, output_dim, row_tile=16384,
                          min_pallas_rows=4096, out_dtype=jnp.float32):
    """x: (b, l, k) float.  Returns relu(Linear(1, output_dim)(x[..., None]))."""
    if x.ndim != 3:
        raise ValueError("x must have shape (b, l, k)")

    w, bias = params
    w = w.reshape(-1).astype(jnp.float32)        # (E,)
    bias = bias.reshape(-1).astype(jnp.float32)  # (E,)
    e = output_dim
    assert w.shape[0] == e and bias.shape[0] == e

    b_, l_, k_ = x.shape
    n = b_ * l_ * k_

    # Tiny-problem fallback: XLA fuses this trivially; skip kernel-launch cost.
    if n < min_pallas_rows:
        z = x.astype(jnp.float32)[..., None] * w + bias
        return jnp.maximum(z, 0.0).astype(out_dtype)

    # Pack P original rows per packed output row so that P*E % 128 == 0.
    p = 128 // math.gcd(e, 128)
    lane = p * e                                  # multiple of 128

    in_itemsize = 4                               # kernel LHS is f32
    out_itemsize = jnp.dtype(out_dtype).itemsize
    sub = max(8, 32 // out_itemsize)              # sublane tile (16 for bf16 out)

    # VMEM budget for double-buffered blocks: the (tm, P) input block is
    # lane-padded to 128 lanes in VMEM (16x inflation for P=8), so budget it
    # at full 128-lane width alongside the output block.  Cap total buffer
    # bytes at ~32 MiB so everything fits v7x's 64 MiB VMEM with headroom.
    per_row_bytes = 128 * in_itemsize + lane * out_itemsize
    tm_cap = max(sub, ((32 << 20) // (2 * per_row_bytes)) // sub * sub)
    tm_cap = min(tm_cap, row_tile)

    rem = n % p
    n_packed = pl.cdiv(n, p)                      # exact packed-row count

    # Flat value vector.  No tile-boundary padding: the grid handles the
    # ragged last block.  Only pad to a multiple of P (a few elements) when
    # n % P != 0.
    t_flat = x.reshape(n)
    if x.dtype != jnp.float32:
        t_flat = t_flat.astype(jnp.float32)
    if rem:
        t_flat = jnp.pad(t_flat, (0, p - rem))
    t_packed = t_flat.reshape(n_packed, p)

    tm = _choose_row_tile(n_packed, tm_cap, sub)
    grid = (pl.cdiv(n_packed, tm),)

    # W_exp[j, j*E + i] = w[i]; bias tiled P times along lanes.
    w_exp = jnp.kron(jnp.eye(p, dtype=jnp.float32), w.reshape(1, e))  # (P, P*E)
    b_tiled = jnp.tile(bias.reshape(1, e), (1, p))                    # (1, P*E)

    tm_pad = _round_up(tm, 8)
    vmem_need = (2 * tm_pad * (128 * in_itemsize + lane * out_itemsize)
                 + 2 * (p * lane + lane) * 4 + (2 << 20))
    vmem_limit = int(min(max(vmem_need, 16 << 20), 48 << 20))

    cost = pl.CostEstimate(
        flops=2 * n_packed * p * lane,
        transcendentals=0,
        bytes_accessed=n_packed * p * in_itemsize
        + n_packed * lane * out_itemsize
        + (p * lane + lane) * 4,
    )

    out_packed = pl.pallas_call(
        _value_encoder_kernel,
        out_shape=jax.ShapeDtypeStruct((n_packed, lane), out_dtype),
        grid_spec=pl.GridSpec(
            grid=grid,
            in_specs=[
                pl.BlockSpec((tm, p), lambda i: (i, 0)),
                pl.BlockSpec((p, lane), lambda i: (0, 0)),
                pl.BlockSpec((1, lane), lambda i: (0, 0)),
            ],
            out_specs=pl.BlockSpec((tm, lane), lambda i: (i, 0)),
        ),
        compiler_params=pltpu.CompilerParams(
            dimension_semantics=("parallel",),
            vmem_limit_bytes=vmem_limit,
        ),
        cost_estimate=cost,
    )(t_packed, w_exp, b_tiled)

    # Row-major (n_packed, P*E) == (n_packed*P, E): free reshape.
    out = out_packed.reshape(n_packed * p, e)
    if rem:
        # Rare ragged-tail case only: drop the < P garbage rows of the last
        # packed row (this is the only path that pays an output copy).
        out = out[:n]
    return out.reshape(b_, l_, k_, e)


def init_value_encoder_params(output_dim, seed=0):
    """Deterministic init matching nn.Linear(1, output_dim): bound = 1/sqrt(1)."""
    k1, k2 = jax.random.split(jax.random.PRNGKey(seed))
    w = jax.random.uniform(k1, (output_dim,), jnp.float32, -1.0, 1.0)
    b = jax.random.uniform(k2, (output_dim,), jnp.float32, -1.0, 1.0)
    return (w, b)


def _reference(x, params):
    """Pure-JAX reference mirroring the PyTorch forward."""
    w, b = params
    z = x.astype(jnp.float32)[..., None] * w.reshape(-1) + b.reshape(-1)
    return jnp.maximum(z, 0.0)


if __name__ == "__main__":
    output_dim = 16

    key = jax.random.PRNGKey(0)
    kx, kx2, kx3 = jax.random.split(key, 3)
    params = init_value_encoder_params(output_dim, seed=0)

    # 1) Small aligned shape (n % P == 0 -> fully zero-copy wrapper path).
    batch, seq, k = 2, 8, 4
    x = jax.random.uniform(kx, (batch, seq, k), jnp.float32, -5.0, 5.0)
    out = value_encoder_forward(x, params, output_dim=output_dim,
                                min_pallas_rows=0)
    jax.block_until_ready(out)
    ref = _reference(x, params)
    assert out.shape == (batch, seq, k, output_dim)
    assert jnp.allclose(out, ref, atol=1e-4, rtol=1e-5), \
        float(jnp.max(jnp.abs(out - ref)))

    # 2) Ragged shape (n % P != 0 -> tiny pad + tail slice path).
    x2 = jax.random.uniform(kx2, (4, 37, 5), jnp.float32, -5.0, 5.0)
    out2 = value_encoder_forward(x2, params, output_dim=output_dim,
                                 min_pallas_rows=0)
    jax.block_until_ready(out2)
    ref2 = _reference(x2, params)
    assert out2.shape == (4, 37, 5, output_dim)
    assert jnp.allclose(out2, ref2, atol=1e-4, rtol=1e-5), \
        float(jnp.max(jnp.abs(out2 - ref2)))

    # 3) Multi-step grid (forced small row_tile) exercising the ragged last
    #    grid block and the parallel dimension semantics.
    x3 = jax.random.uniform(kx3, (2, 24, 4), jnp.float32, -5.0, 5.0)
    out3 = value_encoder_forward(x3, params, output_dim=output_dim,
                                 min_pallas_rows=0, row_tile=8)
    jax.block_until_ready(out3)
    ref3 = _reference(x3, params)
    assert out3.shape == (2, 24, 4, output_dim)
    assert jnp.allclose(out3, ref3, atol=1e-4, rtol=1e-5), \
        float(jnp.max(jnp.abs(out3 - ref3)))

    print("KERNEL_OK")
</pallas_src>

<mosaic_0001>
module attributes {stable_mosaic.version = 11 : i64} {
  func.func @_value_encoder_kernel(%arg0: i32, %arg1: memref<8x8xf32, #tpu.memory_space<vmem>>, %arg2: memref<8x128xf32, #tpu.memory_space<vmem>>, %arg3: memref<1x128xf32, #tpu.memory_space<vmem>>, %arg4: memref<8x128xf32, #tpu.memory_space<vmem>>) attributes {dimension_semantics = [#tpu.dimension_semantics<parallel>], iteration_bounds = array<i64: 1>, scalar_prefetch = 0 : i64, scratch_operands = 0 : i64, tpu.core_type = #tpu.core_type<tc>, window_params = [{transform_indices = @transform_0, window_bounds = array<i64: 8, 8>}, {pipeline_mode = #tpu.pipeline_mode<synchronous>, transform_indices = @transform_1, window_bounds = array<i64: 8, 128>}, {pipeline_mode = #tpu.pipeline_mode<synchronous>, transform_indices = @transform_2, window_bounds = array<i64: 1, 128>}, {transform_indices = @transform_3, window_bounds = array<i64: 8, 128>}]} {
    %c0 = arith.constant 0 : index
    %c0_0 = arith.constant 0 : index
    %0 = vector.load %arg1[%c0, %c0_0] : memref<8x8xf32, #tpu.memory_space<vmem>>, vector<8x8xf32>
    %c0_1 = arith.constant 0 : index
    %c0_2 = arith.constant 0 : index
    %1 = vector.load %arg2[%c0_1, %c0_2] : memref<8x128xf32, #tpu.memory_space<vmem>>, vector<8x128xf32>
    %cst = arith.constant dense<0.000000e+00> : vector<8x128xf32>
    %2 = tpu.matmul %0, %1, %cst {dimension_numbers = #tpu.dot_dimension_numbers<[1], [0], [0], [1], [0, 0, 1, 1], [], []>, precision = #tpu.contract_precision<fp32>} : vector<8x8xf32>, vector<8x128xf32>, vector<8x128xf32> -> vector<8x128xf32>
    %c0_3 = arith.constant 0 : index
    %c0_4 = arith.constant 0 : index
    %3 = vector.load %arg3[%c0_3, %c0_4] : memref<1x128xf32, #tpu.memory_space<vmem>>, vector<1x128xf32>
    %4 = vector.broadcast %3 : vector<1x128xf32> to vector<8x128xf32>
    %5 = arith.addf %2, %4 : vector<8x128xf32>
    %cst_5 = arith.constant 0.000000e+00 : f32
    %6 = vector.broadcast %cst_5 : f32 to vector<8x128xf32>
    %7 = arith.maximumf %5, %6 : vector<8x128xf32>
    %c0_6 = arith.constant 0 : index
    %c0_7 = arith.constant 0 : index
    %8 = vector.load %arg4[%c0_6, %c0_7] : memref<8x128xf32, #tpu.memory_space<vmem>>, vector<8x128xf32>
    tpu.vector_store %arg4[%c0_6, %c0_7], %7 {strides = array<i32>} : memref<8x128xf32, #tpu.memory_space<vmem>>, vector<8x128xf32>,
    return
  }
  func.func @transform_0(%arg0: i32) -> (i32, i32) {
    %c0_i32 = arith.constant 0 : i32
    %c0_i32_0 = arith.constant 0 : i32
    return %arg0, %c0_i32 : i32, i32
  }
  func.func @transform_1(%arg0: i32) -> (i32, i32) {
    %c0_i32 = arith.constant 0 : i32
    %c0_i32_0 = arith.constant 0 : i32
    %c0_i32_1 = arith.constant 0 : i32
    return %c0_i32, %c0_i32_0 : i32, i32
  }
  func.func @transform_2(%arg0: i32) -> (i32, i32) {
    %c0_i32 = arith.constant 0 : i32
    %c0_i32_0 = arith.constant 0 : i32
    %c0_i32_1 = arith.constant 0 : i32
    return %c0_i32, %c0_i32_0 : i32, i32
  }
  func.func @transform_3(%arg0: i32) -> (i32, i32) {
    %c0_i32 = arith.constant 0 : i32
    %c0_i32_0 = arith.constant 0 : i32
    return %arg0, %c0_i32 : i32, i32
  }
}

</mosaic_0001>

<llo_original>
// kernel: value_encoder_forward.1
$region0: #{value_encoder_forward.1}
  #allocation0 [shape = 'u32[]', space=smem, size = 0x4, offset = 0x4, fixed_abs, tag = 'smem constant byte address 0x4 - core index']
  #allocation1 [shape = 'u32[144,128]{1,0:T(1,128)}', space=vmem, size = 0x12000, scoped, tag = 'internal scratch']
  %s0 = inlined_call_operand.vmem [shape: f32[8,8], index: 0, kind: input, shape index: {}]
  %s1 = inlined_call_operand.vmem [shape: f32[8,128], index: 1, kind: input, shape index: {}]
  %s2 = inlined_call_operand.vmem [shape: f32[1,128], index: 2, kind: input, shape index: {}]
  %s3 = inlined_call_operand.vmem [shape: f32[8,128], index: 3, kind: output, shape index: {}]
  %s4 = sld [smem:[#allocation0]]
  $region22: #{value_encoder_forward.1} parent=0
    _
  %s6 = ssub.s32 1, %s4
  %s7 = scalar_select 0, %s6, %s4
  // Predicated region
  $region2: #{value_encoder_forward.1} parent=0 // pred_check
    _
  $region3: #{value_encoder_forward.1} parent=0 // pred_check_branch
    %9 = sbr.rel (0) target = $region5
  $region4: #{value_encoder_forward.1} parent=0 // pred_region
    _
  $region5: #{value_encoder_forward.1} parent=0 // pred_fallthru
    _
  // Predicated region
  $region6: #{value_encoder_forward.1} parent=0 // pred_check
    _
  $region7: #{value_encoder_forward.1} parent=0 // pred_check_branch
    %11 = sbr.rel (0) target = $region9
  $region8: #{value_encoder_forward.1} parent=0 // pred_region
    _
  $region9: #{value_encoder_forward.1} parent=0 // pred_fallthru
    _
  // Predicated region
  $region10: #{value_encoder_forward.1} parent=0 // pred_check
    _
  $region11: #{value_encoder_forward.1} parent=0 // pred_check_branch
    %13 = sbr.rel (0) target = $region13
  $region12: #{value_encoder_forward.1} parent=0 // pred_region
    _
  $region13: #{value_encoder_forward.1} parent=0 // pred_fallthru
    _
  %v14 = vld [vmem:[%s0] sm:$0xff]
  %v15 = vld [vmem:[%s1] sm:$0xff]
  %v16 = vld [vmem:[%s2] sm:$0x1]
  %v18 = vlaneseq
  %v19 = vshrl.u32 %v18, 7
  %v20 = vsub.s32 0, %v19
  %v21 = vrot.slane %v16, %v20
  %vm23 = vcmask 64512
  %v25 = vsel %vm23, %v14, 0
  %27 = vmatprep.subr.mxu0 0.0
  %v28 = vand.u32 %v15, 4294901760
  %29 = vmatpush1.msra.mxu0 %v28
  %30 = vmatprep.subr.mxu0 0.0
  %31 = vmatpush1.msra.mxu0 0.0
  %32 = vmatprep.subr.mxu0 0.0
  %33 = vmatpush1.msra.mxu0 0.0
  %34 = vmatprep.subr.mxu0 0.0
  %35 = vmatpush1.msra.mxu0 0.0
  %36 = vmatprep.subr.mxu0 0.0
  %37 = vmatpush1.msra.mxu0 0.0
  %38 = vmatprep.subr.mxu0 0.0
  %39 = vmatpush1.msra.mxu0 0.0
  %40 = vmatprep.subr.mxu0 0.0
  %41 = vmatpush1.msra.mxu0 0.0
  %42 = vmatprep.subr.mxu0 0.0
  %43 = vmatpush1.msra.mxu0 0.0
  %44 = vmatprep.subr.mxu0 0.0
  %45 = vmatpush1.msra.mxu0 0.0
  %46 = vmatprep.subr.mxu0 0.0
  %47 = vmatpush1.msra.mxu0 0.0
  %48 = vmatprep.subr.mxu0 0.0
  %49 = vmatpush1.msra.mxu0 0.0
  %50 = vmatprep.subr.mxu0 0.0
  %51 = vmatpush1.msra.mxu0 0.0
  %52 = vmatprep.subr.mxu0 0.0
  %53 = vmatpush1.msra.mxu0 0.0
  %54 = vmatprep.subr.mxu0 0.0
  %55 = vmatpush1.msra.mxu0 0.0
  %56 = vmatprep.subr.mxu0 0.0
  %57 = vmatpush1.msra.mxu0 0.0
  %58 = vmatprep.subr.mxu0 0.0
  %59 = vmatpush1.msra.mxu0 0.0
  %60 = vmatprep.subr.mxu0 0.0
  %61 = vmatpush1.msra.mxu0 0.0
  %62 = vmatprep.subr.mxu0 0.0
  %63 = vmatpush1.msra.mxu0 0.0
  %64 = vmatprep.subr.mxu0 0.0
  %65 = vmatpush1.msra.mxu0 0.0
  %66 = vmatprep.subr.mxu0 0.0
  %67 = vmatpush1.msra.mxu0 0.0
  %68 = vmatprep.subr.mxu0 0.0
  %69 = vmatpush1.msra.mxu0 0.0
  %70 = vmatprep.subr.mxu0 0.0
  %71 = vmatpush1.msra.mxu0 0.0
  %72 = vmatprep.subr.mxu0 0.0
  %73 = vmatpush1.msra.mxu0 0.0
  %74 = vmatprep.subr.mxu0 0.0
  %75 = vmatpush1.msra.mxu0 0.0
  %76 = vmatprep.subr.mxu0 0.0
  %77 = vmatpush1.msra.mxu0 0.0
  %78 = vmatprep.subr.mxu0 0.0
  %79 = vmatpush1.msra.mxu0 0.0
  %80 = vmatprep.subr.mxu0 0.0
  %81 = vmatpush1.msra.mxu0 0.0
  %82 = vmatprep.subr.mxu0 0.0
  %83 = vmatpush1.msra.mxu0 0.0
  %84 = vmatprep.subr.mxu0 0.0
  %85 = vmatpush1.msra.mxu0 0.0
  %86 = vmatprep.subr.mxu0 0.0
  %87 = vmatpush1.msra.mxu0 0.0
  %88 = vmatprep.subr.mxu0 0.0
  %89 = vmatpush1.msra.mxu0 0.0
  %90 = vmatprep.subr.mxu0 0.0
  %91 = vmatpush1.msra.mxu0 0.0
  %92 = vmatprep.mubr.f32.mxu0 0.0
  %v93 = vand.u32 %v25, 4294901760
  %v94 = vsub.f32 %v25, %v93
  %v95 = vand.u32 %v94, 4294901760
  %v96 = vsub.f32 %v94, %v95
  %v97 = vand.u32 %v96, 4294901760
  %98 = vmatmul.mubr.f32.gmra.mrb[0].mxu0 %v97
  %v99 = vpop.f32.mrb[0].mxu0
  %v100 = vadd.f32 %v21, %v99
  %v101 = vpop.f32.mrb[0].mxu0
  %102 = vdwg.mxu0
  %103 = vmatprep.subr.mxu0 0.0
  %v104 = vand.u32 %v15, 4294901760
  %v105 = vsub.f32 %v15, %v104
  %v106 = vand.u32 %v105, 4294901760
  %v107 = vsub.f32 %v105, %v106
  %v108 = vand.u32 %v107, 4294901760
  %109 = vmatpush1.msra.mxu0 %v108
  %110 = vmatprep.subr.mxu0 0.0
  %111 = vmatpush1.msra.mxu0 0.0
  %112 = vmatprep.subr.mxu0 0.0
  %113 = vmatpush1.msra.mxu0 0.0
  %114 = vmatprep.subr.mxu0 0.0
  %115 = vmatpush1.msra.mxu0 0.0
  %116 = vmatprep.subr.mxu0 0.0
  %117 = vmatpush1.msra.mxu0 0.0
  %118 = vmatprep.subr.mxu0 0.0
  %119 = vmatpush1.msra.mxu0 0.0
  %120 = vmatprep.subr.mxu0 0.0
  %121 = vmatpush1.msra.mxu0 0.0
  %122 = vmatprep.subr.mxu0 0.0
  %123 = vmatpush1.msra.mxu0 0.0
  %124 = vmatprep.subr.mxu0 0.0
  %125 = vmatpush1.msra.mxu0 0.0
  %126 = vmatprep.subr.mxu0 0.0
  %127 = vmatpush1.msra.mxu0 0.0
  %128 = vmatprep.subr.mxu0 0.0
  %129 = vmatpush1.msra.mxu0 0.0
  %130 = vmatprep.subr.mxu0 0.0
  %131 = vmatpush1.msra.mxu0 0.0
  %132 = vmatprep.subr.mxu0 0.0
  %133 = vmatpush1.msra.mxu0 0.0
  %134 = vmatprep.subr.mxu0 0.0
  %135 = vmatpush1.msra.mxu0 0.0
  %136 = vmatprep.subr.mxu0 0.0
  %137 = vmatpush1.msra.mxu0 0.0
  %138 = vmatprep.subr.mxu0 0.0
  %139 = vmatpush1.msra.mxu0 0.0
  %140 = vmatprep.subr.mxu0 0.0
  %141 = vmatpush1.msra.mxu0 0.0
  %142 = vmatprep.subr.mxu0 0.0
  %143 = vmatpush1.msra.mxu0 0.0
  %144 = vmatprep.subr.mxu0 0.0
  %145 = vmatpush1.msra.mxu0 0.0
  %146 = vmatprep.subr.mxu0 0.0
  %147 = vmatpush1.msra.mxu0 0.0
  %148 = vmatprep.subr.mxu0 0.0
  %149 = vmatpush1.msra.mxu0 0.0
  %150 = vmatprep.subr.mxu0 0.0
  %151 = vmatpush1.msra.mxu0 0.0
  %152 = vmatprep.subr.mxu0 0.0
  %153 = vmatpush1.msra.mxu0 0.0
  %154 = vmatprep.subr.mxu0 0.0
  %155 = vmatpush1.msra.mxu0 0.0
  %156 = vmatprep.subr.mxu0 0.0
  %157 = vmatpush1.msra.mxu0 0.0
  %158 = vmatprep.subr.mxu0 0.0
  %159 = vmatpush1.msra.mxu0 0.0
  %160 = vmatprep.subr.mxu0 0.0
  %161 = vmatpush1.msra.mxu0 0.0
  %162 = vmatprep.subr.mxu0 0.0
  %163 = vmatpush1.msra.mxu0 0.0
  %164 = vmatprep.subr.mxu0 0.0
  %165 = vmatpush1.msra.mxu0 0.0
  %166 = vmatprep.subr.mxu0 0.0
  %167 = vmatpush1.msra.mxu0 0.0
  %168 = vmatprep.subr.mxu0 0.0
  %169 = vmatpush1.msra.mxu0 0.0
  %170 = vmatprep.subr.mxu0 0.0
  %171 = vmatpush1.msra.mxu0 0.0
  %172 = vmatprep.mubr.f32.mxu0 0.0
  %v173 = vand.u32 %v25, 4294901760
  %174 = vmatmul.mubr.f32.gmra.mrb[0].mxu0 %v173
  %v175 = vpop.f32.mrb[0].mxu0
  %v176 = vadd.f32 %v100, %v175
  %v177 = vpop.f32.mrb[0].mxu0
  %178 = vdwg.mxu0
  %179 = vmatprep.subr.mxu0 0.0
  %v180 = vand.u32 %v15, 4294901760
  %v181 = vsub.f32 %v15, %v180
  %182 = vmatpush1.msra.mxu0 %v181
  %183 = vmatprep.subr.mxu0 0.0
  %184 = vmatpush1.msra.mxu0 0.0
  %185 = vmatprep.subr.mxu0 0.0
  %186 = vmatpush1.msra.mxu0 0.0
  %187 = vmatprep.subr.mxu0 0.0
  %188 = vmatpush1.msra.mxu0 0.0
  %189 = vmatprep.subr.mxu0 0.0
  %190 = vmatpush1.msra.mxu0 0.0
  %191 = vmatprep.subr.mxu0 0.0
  %192 = vmatpush1.msra.mxu0 0.0
  %193 = vmatprep.subr.mxu0 0.0
  %194 = vmatpush1.msra.mxu0 0.0
  %195 = vmatprep.subr.mxu0 0.0
  %196 = vmatpush1.msra.mxu0 0.0
  %197 = vmatprep.subr.mxu0 0.0
  %198 = vmatpush1.msra.mxu0 0.0
  %199 = vmatprep.subr.mxu0 0.0
  %200 = vmatpush1.msra.mxu0 0.0
  %201 = vmatprep.subr.mxu0 0.0
  %202 = vmatpush1.msra.mxu0 0.0
  %203 = vmatprep.subr.mxu0 0.0
  %204 = vmatpush1.msra.mxu0 0.0
  %205 = vmatprep.subr.mxu0 0.0
  %206 = vmatpush1.msra.mxu0 0.0
  %207 = vmatprep.subr.mxu0 0.0
  %208 = vmatpush1.msra.mxu0 0.0
  %209 = vmatprep.subr.mxu0 0.0
  %210 = vmatpush1.msra.mxu0 0.0
  %211 = vmatprep.subr.mxu0 0.0
  %212 = vmatpush1.msra.mxu0 0.0
  %213 = vmatprep.subr.mxu0 0.0
  %214 = vmatpush1.msra.mxu0 0.0
  %215 = vmatprep.subr.mxu0 0.0
  %216 = vmatpush1.msra.mxu0 0.0
  %217 = vmatprep.subr.mxu0 0.0
  %218 = vmatpush1.msra.mxu0 0.0
  %219 = vmatprep.subr.mxu0 0.0
  %220 = vmatpush1.msra.mxu0 0.0
  %221 = vmatprep.subr.mxu0 0.0
  %222 = vmatpush1.msra.mxu0 0.0
  %223 = vmatprep.subr.mxu0 0.0
  %224 = vmatpush1.msra.mxu0 0.0
  %225 = vmatprep.subr.mxu0 0.0
  %226 = vmatpush1.msra.mxu0 0.0
  %227 = vmatprep.subr.mxu0 0.0
  %228 = vmatpush1.msra.mxu0 0.0
  %229 = vmatprep.subr.mxu0 0.0
  %230 = vmatpush1.msra.mxu0 0.0
  %231 = vmatprep.subr.mxu0 0.0
  %232 = vmatpush1.msra.mxu0 0.0
  %233 = vmatprep.subr.mxu0 0.0
  %234 = vmatpush1.msra.mxu0 0.0
  %235 = vmatprep.subr.mxu0 0.0
  %236 = vmatpush1.msra.mxu0 0.0
  %237 = vmatprep.subr.mxu0 0.0
  %238 = vmatpush1.msra.mxu0 0.0
  %239 = vmatprep.subr.mxu0 0.0
  %240 = vmatpush1.msra.mxu0 0.0
  %241 = vmatprep.subr.mxu0 0.0
  %242 = vmatpush1.msra.mxu0 0.0
  %243 = vmatprep.subr.mxu0 0.0
  %244 = vmatpush1.msra.mxu0 0.0
  %245 = vmatprep.mubr.f32.mxu0 0.0
  %v246 = vand.u32 %v25, 4294901760
  %v247 = vsub.f32 %v25, %v246
  %248 = vmatmul.mubr.f32.gmra.mrb[0].mxu0 %v247
  %v249 = vpop.f32.mrb[0].mxu0
  %v250 = vadd.f32 %v176, %v249
  %v251 = vpop.f32.mrb[0].mxu0
  %252 = vdwg.mxu0
  %253 = vmatprep.subr.mxu0 0.0
  %v254 = vand.u32 %v15, 4294901760
  %255 = vmatpush1.msra.mxu0 %v254
  %256 = vmatprep.subr.mxu0 0.0
  %257 = vmatpush1.msra.mxu0 0.0
  %258 = vmatprep.subr.mxu0 0.0
  %259 = vmatpush1.msra.mxu0 0.0
  %260 = vmatprep.subr.mxu0 0.0
  %261 = vmatpush1.msra.mxu0 0.0
  %262 = vmatprep.subr.mxu0 0.0
  %263 = vmatpush1.msra.mxu0 0.0
  %264 = vmatprep.subr.mxu0 0.0
  %265 = vmatpush1.msra.mxu0 0.0
  %266 = vmatprep.subr.mxu0 0.0
  %267 = vmatpush1.msra.mxu0 0.0
  %268 = vmatprep.subr.mxu0 0.0
  %269 = vmatpush1.msra.mxu0 0.0
  %270 = vmatprep.subr.mxu0 0.0
  %271 = vmatpush1.msra.mxu0 0.0
  %272 = vmatprep.subr.mxu0 0.0
  %273 = vmatpush1.msra.mxu0 0.0
  %274 = vmatprep.subr.mxu0 0.0
  %275 = vmatpush1.msra.mxu0 0.0
  %276 = vmatprep.subr.mxu0 0.0
  %277 = vmatpush1.msra.mxu0 0.0
  %278 = vmatprep.subr.mxu0 0.0
  %279 = vmatpush1.msra.mxu0 0.0
  %280 = vmatprep.subr.mxu0 0.0
  %281 = vmatpush1.msra.mxu0 0.0
  %282 = vmatprep.subr.mxu0 0.0
  %283 = vmatpush1.msra.mxu0 0.0
  %284 = vmatprep.subr.mxu0 0.0
  %285 = vmatpush1.msra.mxu0 0.0
  %286 = vmatprep.subr.mxu0 0.0
  %287 = vmatpush1.msra.mxu0 0.0
  %288 = vmatprep.subr.mxu0 0.0
  %289 = vmatpush1.msra.mxu0 0.0
  %290 = vmatprep.subr.mxu0 0.0
  %291 = vmatpush1.msra.mxu0 0.0
  %292 = vmatprep.subr.mxu0 0.0
  %293 = vmatpush1.msra.mxu0 0.0
  %294 = vmatprep.subr.mxu0 0.0
  %295 = vmatpush1.msra.mxu0 0.0
  %296 = vmatprep.subr.mxu0 0.0
  %297 = vmatpush1.msra.mxu0 0.0
  %298 = vmatprep.subr.mxu0 0.0
  %299 = vmatpush1.msra.mxu0 0.0
  %300 = vmatprep.subr.mxu0 0.0
  %301 = vmatpush1.msra.mxu0 0.0
  %302 = vmatprep.subr.mxu0 0.0
  %303 = vmatpush1.msra.mxu0 0.0
  %304 = vmatprep.subr.mxu0 0.0
  %305 = vmatpush1.msra.mxu0 0.0
  %306 = vmatprep.subr.mxu0 0.0
  %307 = vmatpush1.msra.mxu0 0.0
  %308 = vmatprep.subr.mxu0 0.0
  %309 = vmatpush1.msra.mxu0 0.0
  %310 = vmatprep.subr.mxu0 0.0
  %311 = vmatpush1.msra.mxu0 0.0
  %312 = vmatprep.subr.mxu0 0.0
  %313 = vmatpush1.msra.mxu0 0.0
  %314 = vmatprep.subr.mxu0 0.0
  %315 = vmatpush1.msra.mxu0 0.0
  %316 = vmatprep.subr.mxu0 0.0
  %317 = vmatpush1.msra.mxu0 0.0
  %318 = vmatprep.mubr.f32.mxu0 0.0
  %v319 = vand.u32 %v25, 4294901760
  %v320 = vsub.f32 %v25, %v319
  %v321 = vand.u32 %v320, 4294901760
  %322 = vmatmul.mubr.f32.gmra.mrb[0].mxu0 %v321
  %v323 = vpop.f32.mrb[0].mxu0
  %v324 = vadd.f32 %v250, %v323
  %v325 = vpop.f32.mrb[0].mxu0
  %326 = vdwg.mxu0
  %327 = vmatprep.subr.mxu0 0.0
  %v328 = vand.u32 %v15, 4294901760
  %v329 = vsub.f32 %v15, %v328
  %v330 = vand.u32 %v329, 4294901760
  %331 = vmatpush1.msra.mxu0 %v330
  %332 = vmatprep.subr.mxu0 0.0
  %333 = vmatpush1.msra.mxu0 0.0
  %334 = vmatprep.subr.mxu0 0.0
  %335 = vmatpush1.msra.mxu0 0.0
  %336 = vmatprep.subr.mxu0 0.0
  %337 = vmatpush1.msra.mxu0 0.0
  %338 = vmatprep.subr.mxu0 0.0
  %339 = vmatpush1.msra.mxu0 0.0
  %340 = vmatprep.subr.mxu0 0.0
  %341 = vmatpush1.msra.mxu0 0.0
  %342 = vmatprep.subr.mxu0 0.0
  %343 = vmatpush1.msra.mxu0 0.0
  %344 = vmatprep.subr.mxu0 0.0
  %345 = vmatpush1.msra.mxu0 0.0
  %346 = vmatprep.subr.mxu0 0.0
  %347 = vmatpush1.msra.mxu0 0.0
  %348 = vmatprep.subr.mxu0 0.0
  %349 = vmatpush1.msra.mxu0 0.0
  %350 = vmatprep.subr.mxu0 0.0
  %351 = vmatpush1.msra.mxu0 0.0
  %352 = vmatprep.subr.mxu0 0.0
  %353 = vmatpush1.msra.mxu0 0.0
  %354 = vmatprep.subr.mxu0 0.0
  %355 = vmatpush1.msra.mxu0 0.0
  %356 = vmatprep.subr.mxu0 0.0
  %357 = vmatpush1.msra.mxu0 0.0
  %358 = vmatprep.subr.mxu0 0.0
  %359 = vmatpush1.msra.mxu0 0.0
  %360 = vmatprep.subr.mxu0 0.0
  %361 = vmatpush1.msra.mxu0 0.0
  %362 = vmatprep.subr.mxu0 0.0
  %363 = vmatpush1.msra.mxu0 0.0
  %364 = vmatprep.subr.mxu0 0.0
  %365 = vmatpush1.msra.mxu0 0.0
  %366 = vmatprep.subr.mxu0 0.0
  %367 = vmatpush1.msra.mxu0 0.0
  %368 = vmatprep.subr.mxu0 0.0
  %369 = vmatpush1.msra.mxu0 0.0
  %370 = vmatprep.subr.mxu0 0.0
  %371 = vmatpush1.msra.mxu0 0.0
  %372 = vmatprep.subr.mxu0 0.0
  %373 = vmatpush1.msra.mxu0 0.0
  %374 = vmatprep.subr.mxu0 0.0
  %375 = vmatpush1.msra.mxu0 0.0
  %376 = vmatprep.subr.mxu0 0.0
  %377 = vmatpush1.msra.mxu0 0.0
  %378 = vmatprep.subr.mxu0 0.0
  %379 = vmatpush1.msra.mxu0 0.0
  %380 = vmatprep.subr.mxu0 0.0
  %381 = vmatpush1.msra.mxu0 0.0
  %382 = vmatprep.subr.mxu0 0.0
  %383 = vmatpush1.msra.mxu0 0.0
  %384 = vmatprep.subr.mxu0 0.0
  %385 = vmatpush1.msra.mxu0 0.0
  %386 = vmatprep.subr.mxu0 0.0
  %387 = vmatpush1.msra.mxu0 0.0
  %388 = vmatprep.subr.mxu0 0.0
  %389 = vmatpush1.msra.mxu0 0.0
  %390 = vmatprep.subr.mxu0 0.0
  %391 = vmatpush1.msra.mxu0 0.0
  %392 = vmatprep.subr.mxu0 0.0
  %393 = vmatpush1.msra.mxu0 0.0
  %394 = vmatprep.mubr.f32.mxu0 0.0
  %v395 = vand.u32 %v25, 4294901760
  %396 = vmatmul.mubr.f32.gmra.mrb[0].mxu0 %v395
  %v397 = vpop.f32.mrb[0].mxu0
  %v398 = vadd.f32 %v324, %v397
  %v399 = vpop.f32.mrb[0].mxu0
  %400 = vdwg.mxu0
  %401 = vmatprep.subr.mxu0 0.0
  %v402 = vand.u32 %v15, 4294901760
  %403 = vmatpush1.msra.mxu0 %v402
  %404 = vmatprep.subr.mxu0 0.0
  %405 = vmatpush1.msra.mxu0 0.0
  %406 = vmatprep.subr.mxu0 0.0
  %407 = vmatpush1.msra.mxu0 0.0
  %408 = vmatprep.subr.mxu0 0.0
  %409 = vmatpush1.msra.mxu0 0.0
  %410 = vmatprep.subr.mxu0 0.0
  %411 = vmatpush1.msra.mxu0 0.0
  %412 = vmatprep.subr.mxu0 0.0
  %413 = vmatpush1.msra.mxu0 0.0
  %414 = vmatprep.subr.mxu0 0.0
  %415 = vmatpush1.msra.mxu0 0.0
  %416 = vmatprep.subr.mxu0 0.0
  %417 = vmatpush1.msra.mxu0 0.0
  %418 = vmatprep.subr.mxu0 0.0
  %419 = vmatpush1.msra.mxu0 0.0
  %420 = vmatprep.subr.mxu0 0.0
  %421 = vmatpush1.msra.mxu0 0.0
  %422 = vmatprep.subr.mxu0 0.0
  %423 = vmatpush1.msra.mxu0 0.0
  %424 = vmatprep.subr.mxu0 0.0
  %425 = vmatpush1.msra.mxu0 0.0
  %426 = vmatprep.subr.mxu0 0.0
  %427 = vmatpush1.msra.mxu0 0.0
  %428 = vmatprep.subr.mxu0 0.0
  %429 = vmatpush1.msra.mxu0 0.0
  %430 = vmatprep.subr.mxu0 0.0
  %431 = vmatpush1.msra.mxu0 0.0
  %432 = vmatprep.subr.mxu0 0.0
  %433 = vmatpush1.msra.mxu0 0.0
  %434 = vmatprep.subr.mxu0 0.0
  %435 = vmatpush1.msra.mxu0 0.0
  %436 = vmatprep.subr.mxu0 0.0
  %437 = vmatpush1.msra.mxu0 0.0
  %438 = vmatprep.subr.mxu0 0.0
  %439 = vmatpush1.msra.mxu0 0.0
  %440 = vmatprep.subr.mxu0 0.0
  %441 = vmatpush1.msra.mxu0 0.0
  %442 = vmatprep.subr.mxu0 0.0
  %443 = vmatpush1.msra.mxu0 0.0
  %444 = vmatprep.subr.mxu0 0.0
  %445 = vmatpush1.msra.mxu0 0.0
  %446 = vmatprep.subr.mxu0 0.0
  %447 = vmatpush1.msra.mxu0 0.0
  %448 = vmatprep.subr.mxu0 0.0
  %449 = vmatpush1.msra.mxu0 0.0
  %450 = vmatprep.subr.mxu0 0.0
  %451 = vmatpush1.msra.mxu0 0.0
  %452 = vmatprep.subr.mxu0 0.0
  %453 = vmatpush1.msra.mxu0 0.0
  %454 = vmatprep.subr.mxu0 0.0
  %455 = vmatpush1.msra.mxu0 0.0
  %456 = vmatprep.subr.mxu0 0.0
  %457 = vmatpush1.msra.mxu0 0.0
  %458 = vmatprep.subr.mxu0 0.0
  %459 = vmatpush1.msra.mxu0 0.0
  %460 = vmatprep.subr.mxu0 0.0
  %461 = vmatpush1.msra.mxu0 0.0
  %462 = vmatprep.subr.mxu0 0.0
  %463 = vmatpush1.msra.mxu0 0.0
  %464 = vmatprep.subr.mxu0 0.0
  %465 = vmatpush1.msra.mxu0 0.0
  %466 = vmatprep.mubr.f32.mxu0 0.0
  %v467 = vand.u32 %v25, 4294901760
  %468 = vmatmul.mubr.f32.gmra.mrb[0].mxu0 %v467
  %v469 = vpop.f32.mrb[0].mxu0
  %v470 = vadd.f32 %v398, %v469
  %v471 = vpop.f32.mrb[0].mxu0
  %472 = vdwg.mxu0
  %v473 = vmax.f32 %v470, 0.0
  %474 = vst [vmem:[%s3] sm:$0xff] %v473
  // Predicated region
  $region14: #{value_encoder_forward.1} parent=0 // pred_check
    _
  $region15: #{value_encoder_forward.1} parent=0 // pred_check_branch
    %476 = sbr.rel (0) target = $region17
  $region16: #{value_encoder_forward.1} parent=0 // pred_region
    _
  $region17: #{value_encoder_forward.1} parent=0 // pred_fallthru
    _
  // Predicated region
  $region18: #{value_encoder_forward.1} parent=0 // pred_check
    _
  $region19: #{value_encoder_forward.1} parent=0 // pred_check_branch
    %478 = sbr.rel (0) target = $region21
  $region20: #{value_encoder_forward.1} parent=0 // pred_region
    _
  $region21: #{value_encoder_forward.1} parent=0 // pred_fallthru
    _

</llo_original>
